<compile_context>
chip_gen: v5e
topology: v5e:2x2
jax: 0.10.0
libtpu: 0.0.40
codegen_flags: <defaults>
</compile_context>

<pallas_src>
import jax
import jax.numpy as jnp
from jax import lax
from jax.experimental import pallas as pl
from jax.experimental.pallas import tpu as pltpu

_LANE = 128


def _nlinear_kernel(x_ref, w_ref, b_ref, o_ref):
    """out[p, m] = sum_l W'[p, l] * x[m, l] + b[p].

    x_ref: (TM, L)  rows = flattened (batch, channel) in sublanes, seq in lanes
    w_ref: (P, L)   folded weight (seq_last normalization absorbed), VMEM resident
    b_ref: (P, 1)   bias column, VMEM resident
    o_ref: (P, TM)  lane-dense output block
    """
    x = x_ref[...].astype(jnp.float32)
    w = w_ref[...].astype(jnp.float32)
    # Contract L on both operands -> (P, TM).  Lane-dense output; each output
    # column m depends only on row m of x, so padded rows of a partial last
    # block only affect masked-out columns.
    y = lax.dot_general(w, x, (((1,), (1,)), ((), ())),
                        preferred_element_type=jnp.float32)
    o_ref[...] = (y + b_ref[...].astype(jnp.float32)).astype(o_ref.dtype)


def _round_up(v, m):
    return ((v + m - 1) // m) * m


def nlinear_forward(x, weight, bias, *, block_m=8192):
    """NLinear forward.  x: [B, L, C]; weight: [P, L]; bias: [P] -> [B, P, C]."""
    B, L, C = x.shape
    P = weight.shape[0]
    M = B * C

    # Fold the `seq_last` normalization into the weight:
    #   (x - last) @ W^T + b + last == x @ W'^T + b
    # with W'[p, l] = W[p, l] + (l == L-1) * (1 - sum_l W[p, l]).
    # Numerically identical up to f32 rounding order.
    wf = weight.astype(jnp.float32)
    wf = wf.at[:, L - 1].add(1.0 - jnp.sum(wf, axis=1))
    bf = bias.astype(jnp.float32).reshape(P, 1)

    # Rows = flattened (batch, channel) pairs, lanes = seq.
    if C == 1:
        x2d = x.reshape(M, L)   # enc_in == 1 (module config): metadata-only reshape
    else:
        # TODO(synk): for large C a channels-in-lanes layout would avoid this
        # extra HBM transpose pass; with the module's enc_in=1 it is never taken.
        x2d = jnp.transpose(x, (0, 2, 1)).reshape(M, L)

    # Row tiling.  The output block is (P, TM) with TM in lanes, so TM must be a
    # multiple of 128 (or equal the full M).  Keep >= 2 grid steps whenever
    # possible so the "parallel" axis can split across v7x's two TensorCores.
    if M <= _LANE:
        tm = M
    else:
        tm = min(int(block_m), _round_up(pl.cdiv(M, 2), _LANE))
        tm = max(_LANE, (tm // _LANE) * _LANE)
    grid_m = pl.cdiv(M, tm)

    out2d = pl.pallas_call(
        _nlinear_kernel,
        out_shape=jax.ShapeDtypeStruct((P, M), x.dtype),
        grid=(grid_m,),
        in_specs=[
            pl.BlockSpec((tm, L), lambda i: (i, 0)),   # x tiles: auto-pipelined
            pl.BlockSpec((P, L), lambda i: (0, 0)),    # folded weight: VMEM resident
            pl.BlockSpec((P, 1), lambda i: (0, 0)),    # bias column: VMEM resident
        ],
        out_specs=pl.BlockSpec((P, tm), lambda i: (0, i)),  # lane-dense output
        compiler_params=pltpu.CompilerParams(
            dimension_semantics=("parallel",)),        # megacore: rows across TCs
    )(x2d, wf, bf)

    if C == 1:
        return jnp.transpose(out2d).reshape(B, P, 1)
    return jnp.transpose(out2d.reshape(P, B, C), (1, 0, 2))


def reference_forward(x, weight, bias):
    # Pure-JAX reference mirroring the PyTorch Model.forward (individual=False).
    seq_last = x[:, -1:, :]
    xc = x - seq_last
    y = jnp.einsum("blc,pl->bpc", xc, weight) + bias[None, :, None]
    return y + seq_last


if __name__ == "__main__":
    seq_len, pred_len = 24, 1
    key = jax.random.PRNGKey(0)
    kx, kw, kb = jax.random.split(key, 3)

    # Deterministic parameters (nn.Linear-like uniform bound).
    bound = 1.0 / (seq_len ** 0.5)
    weight = jax.random.uniform(kw, (pred_len, seq_len), jnp.float32, -bound, bound)
    bias = jax.random.uniform(kb, (pred_len,), jnp.float32, -bound, bound)

    # Module config: enc_in = 1.  Small block_m so the demo exercises the
    # multi-block pipelined / megacore path (production default is 8192).
    batch, channels = 512, 1
    x = jax.random.normal(kx, (batch, seq_len, channels), dtype=jnp.float32)
    out = jax.block_until_ready(nlinear_forward(x, weight, bias, block_m=128))
    ref = reference_forward(x, weight, bias)
    assert out.shape == (batch, pred_len, channels), out.shape
    assert jnp.allclose(out, ref, atol=1e-5, rtol=1e-5), "mismatch (C=1, even grid)"

    # M not a multiple of the tile -> exercises the masked partial last block.
    batch3 = 300
    x3 = jax.random.normal(jax.random.fold_in(kx, 2),
                           (batch3, seq_len, 1), dtype=jnp.float32)
    out3 = jax.block_until_ready(nlinear_forward(x3, weight, bias))
    ref3 = reference_forward(x3, weight, bias)
    assert out3.shape == (batch3, pred_len, 1), out3.shape
    assert jnp.allclose(out3, ref3, atol=1e-5, rtol=1e-5), "mismatch (partial block)"

    # Also validate the C > 1 layout path of the wrapper.
    batch2, channels2 = 8, 4
    x2 = jax.random.normal(jax.random.fold_in(kx, 1),
                           (batch2, seq_len, channels2), dtype=jnp.float32)
    out2 = jax.block_until_ready(nlinear_forward(x2, weight, bias))
    ref2 = reference_forward(x2, weight, bias)
    assert out2.shape == (batch2, pred_len, channels2), out2.shape
    assert jnp.allclose(out2, ref2, atol=1e-5, rtol=1e-5), "mismatch (C>1)"

    print("KERNEL_OK")
</pallas_src>

<mosaic_0001>
module attributes {stable_mosaic.version = 11 : i64} {
  func.func @_nlinear_kernel(%arg0: i32, %arg1: memref<128x24xf32, #tpu.memory_space<vmem>>, %arg2: memref<1x24xf32, #tpu.memory_space<vmem>>, %arg3: memref<1x1xf32, #tpu.memory_space<vmem>>, %arg4: memref<1x128xf32, #tpu.memory_space<vmem>>) attributes {dimension_semantics = [#tpu.dimension_semantics<parallel>], iteration_bounds = array<i64: 4>, scalar_prefetch = 0 : i64, scratch_operands = 0 : i64, tpu.core_type = #tpu.core_type<tc>, window_params = [{transform_indices = @transform_0, window_bounds = array<i64: 128, 24>}, {pipeline_mode = #tpu.pipeline_mode<synchronous>, transform_indices = @transform_1, window_bounds = array<i64: 1, 24>}, {pipeline_mode = #tpu.pipeline_mode<synchronous>, transform_indices = @transform_2, window_bounds = array<i64: 1, 1>}, {transform_indices = @transform_3, window_bounds = array<i64: 1, 128>}]} {
    %c0 = arith.constant 0 : index
    %c0_0 = arith.constant 0 : index
    %0 = vector.load %arg1[%c0, %c0_0] : memref<128x24xf32, #tpu.memory_space<vmem>>, vector<128x24xf32>
    %c0_1 = arith.constant 0 : index
    %c0_2 = arith.constant 0 : index
    %1 = vector.load %arg2[%c0_1, %c0_2] : memref<1x24xf32, #tpu.memory_space<vmem>>, vector<1x24xf32>
    %cst = arith.constant dense<0.000000e+00> : vector<1x128xf32>
    %2 = tpu.matmul %1, %0, %cst {dimension_numbers = #tpu.dot_dimension_numbers<[1], [1], [0], [0], [0, 0, 1, 0], [], []>} : vector<1x24xf32>, vector<128x24xf32>, vector<1x128xf32> -> vector<1x128xf32>
    %c0_3 = arith.constant 0 : index
    %c0_4 = arith.constant 0 : index
    %3 = vector.load %arg3[%c0_3, %c0_4] : memref<1x1xf32, #tpu.memory_space<vmem>>, vector<1x1xf32>
    %4 = vector.broadcast %3 : vector<1x1xf32> to vector<1x128xf32>
    %5 = arith.addf %2, %4 : vector<1x128xf32>
    %c0_5 = arith.constant 0 : index
    %c0_6 = arith.constant 0 : index
    %6 = vector.load %arg4[%c0_5, %c0_6] : memref<1x128xf32, #tpu.memory_space<vmem>>, vector<1x128xf32>
    tpu.vector_store %arg4[%c0_5, %c0_6], %5 {strides = array<i32>} : memref<1x128xf32, #tpu.memory_space<vmem>>, vector<1x128xf32>,
    return
  }
  func.func @transform_0(%arg0: i32) -> (i32, i32) {
    %c0_i32 = arith.constant 0 : i32
    %c0_i32_0 = arith.constant 0 : i32
    return %arg0, %c0_i32 : i32, i32
  }
  func.func @transform_1(%arg0: i32) -> (i32, i32) {
    %c0_i32 = arith.constant 0 : i32
    %c0_i32_0 = arith.constant 0 : i32
    %c0_i32_1 = arith.constant 0 : i32
    return %c0_i32, %c0_i32_0 : i32, i32
  }
  func.func @transform_2(%arg0: i32) -> (i32, i32) {
    %c0_i32 = arith.constant 0 : i32
    %c0_i32_0 = arith.constant 0 : i32
    %c0_i32_1 = arith.constant 0 : i32
    return %c0_i32, %c0_i32_0 : i32, i32
  }
  func.func @transform_3(%arg0: i32) -> (i32, i32) {
    %c0_i32 = arith.constant 0 : i32
    %c0_i32_0 = arith.constant 0 : i32
    return %c0_i32, %arg0 : i32, i32
  }
}

</mosaic_0001>

<llo_original>
// kernel: tpu_custom_call.1
$region0: #{tpu_custom_call.1}
  #allocation0 [shape = 'u32[]', space=smem, size = 0x4, offset = 0x4, fixed_abs, tag = 'smem constant byte address 0x4 - core index']
  #allocation1 [shape = 'u32[72,128]{1,0:T(1,128)}', space=vmem, size = 0x9000, scoped, tag = 'internal scratch']
  #allocation2 [shape = 'f32[1,1]{1,0:T(1,128)S(1)}', space=vmem, size = 0x200, scoped, tag = 'scoped memory for tpu_custom_call.1']
  %s0 = inlined_call_operand.vmem [shape: f32[512,24], index: 0, kind: input, shape index: {}]
  %s1 = inlined_call_operand.vmem [shape: f32[1,24], index: 1, kind: input, shape index: {}]
  %s2 = inlined_call_operand.<no memory space> [shape: f32[1,1], index: 2, kind: input, shape index: {}]
  %s3 = inlined_call_operand.hbm [shape: f32[1,512], index: 3, kind: output, shape index: {}]
  %s4 = sld [smem:[#allocation0]]
  $region45: #{tpu_custom_call.1} parent=0
    _
  %s6 = ssub.s32 1, %s4
  %s7 = scalar_select 0, %s6, %s4
  %v8 = vstv %s2
  %9 = vst [vmem:[#allocation2] sm:$0x1] %v8
  $region1: #{tpu_custom_call.1} parent=0
    #allocation3 [shape = 'u8[1024]{0}', space=vmem, size = 0x400, scoped, tag = 'output window, operand 0']
    #allocation4 [shape = 's32[2]{0}', space=sflag, size = 0x8, scoped, tag = 'scoped memory for tpu_custom_call.1']
    %10 = vsyncpa [#allocation4], 0
    %s11 = scalar_lea.sflag [#allocation4], 1
    %12 = vsyncpa %s11, 0
    loop: start=0, step=1, limit=6
    $region2: #{tpu_custom_call.1} parent=1 // loop_pre_header
      _
    $region3: #{tpu_custom_call.1} parent=1 // loop_header
      %s14 = sphi 0, %s18
      %p15 = scmp.ge.s32.totalorder %s14, 6
      %s24 = sphi 0, %s26
      %s27 = sphi 0, %s24
      %s28 = sphi 0, %s27
      %s44 = sphi 0, %s28
      %s48 = sphi 0, %s48
      %s50 = sphi 0, %s48
      %s51 = sphi 0, %s50
      %s65 = sphi 0, %s51
      %s69 = sphi 0, %s69
      %s71 = sphi 0, %s69
      %s72 = sphi 0, %s71
      %s86 = sphi 0, %s72
      %s92 = sphi 0, %s94
      %s95 = sphi 0, %s92
      %s96 = sphi 0, %s95
      %s112 = sphi 0, %s96
    $region4: #{tpu_custom_call.1} parent=1 // loop_header_branch
      %17 = sbr.rel (%p15) target = $region8
    $region5: #{tpu_custom_call.1} parent=1 // loop_body
      %s19 = ssub.s32 %s14, 1
      %s20 = ssub.s32 %s14, 2
      %s21 = sadd.s32 %s14, 1
      %s22 = ssub.s32 %s14, %s21
      %p23 = scmp.eq.s32.totalorder %s22, 0
      %s25 = sadd.s32 %s24, 1
      %s26 = scalar_select %p23, %s24, %s25
      %p29 = pneg %p23
      %p30 = scmp.eq.s32.totalorder %s14, 3
      %p31 = por %p29, %p30
      %p32 = scmp.ne.s32.totalorder %s24, %s27
      %p33 = scmp.eq.s32.totalorder %s14, 0
      %p34 = por %p32, %p33
      %p35 = scmp.ne.s32.totalorder %s24, %s27
      %p36 = scmp.eq.s32.totalorder %s19, 3
      %p37 = por %p35, %p36
      %p38 = scmp.ne.s32.totalorder %s27, %s28
      %p39 = scmp.eq.s32.totalorder %s19, 0
      %p40 = por %p38, %p39
      %p41 = scmp.ne.s32.totalorder %s27, %s28
      %p42 = scmp.eq.s32.totalorder %s20, 3
      %p43 = por %p41, %p42
      %p45 = scmp.ne.s32.totalorder %s28, %s44
      %p46 = scmp.eq.s32.totalorder %s20, 0
      %p47 = por %p45, %p46
      %s49 = sadd.s32 %s48, 1
      %p52 = scmp.eq.s32.totalorder %s14, 3
      %p53 = scmp.ne.s32.totalorder %s48, %s50
      %p54 = scmp.eq.s32.totalorder %s14, 0
      %p55 = por %p53, %p54
      %p56 = scmp.ne.s32.totalorder %s48, %s50
      %p57 = scmp.eq.s32.totalorder %s19, 3
      %p58 = por %p56, %p57
      %p59 = scmp.ne.s32.totalorder %s50, %s51
      %p60 = scmp.eq.s32.totalorder %s19, 0
      %p61 = por %p59, %p60
      %p62 = scmp.ne.s32.totalorder %s50, %s51
      %p63 = scmp.eq.s32.totalorder %s20, 3
      %p64 = por %p62, %p63
      %p66 = scmp.ne.s32.totalorder %s51, %s65
      %p67 = scmp.eq.s32.totalorder %s20, 0
      %p68 = por %p66, %p67
      %s70 = sadd.s32 %s69, 1
      %p73 = scmp.eq.s32.totalorder %s14, 3
      %p74 = scmp.ne.s32.totalorder %s69, %s71
      %p75 = scmp.eq.s32.totalorder %s14, 0
      %p76 = por %p74, %p75
      %p77 = scmp.ne.s32.totalorder %s69, %s71
      %p78 = scmp.eq.s32.totalorder %s19, 3
      %p79 = por %p77, %p78
      %p80 = scmp.ne.s32.totalorder %s71, %s72
      %p81 = scmp.eq.s32.totalorder %s19, 0
      %p82 = por %p80, %p81
      %p83 = scmp.ne.s32.totalorder %s71, %s72
      %p84 = scmp.eq.s32.totalorder %s20, 3
      %p85 = por %p83, %p84
      %p87 = scmp.ne.s32.totalorder %s72, %s86
      %p88 = scmp.eq.s32.totalorder %s20, 0
      %p89 = por %p87, %p88
      %s90 = ssub.s32 %s14, %s21
      %p91 = scmp.eq.s32.totalorder %s90, 0
      %s93 = sadd.s32 %s92, 1
      %s94 = scalar_select %p91, %s92, %s93
      %p97 = pneg %p91
      %p98 = scmp.eq.s32.totalorder %s14, 3
      %p99 = por %p97, %p98
      %p100 = scmp.ne.s32.totalorder %s92, %s95
      %p101 = scmp.eq.s32.totalorder %s14, 0
      %p102 = por %p100, %p101
      %p103 = scmp.ne.s32.totalorder %s92, %s95
      %p104 = scmp.eq.s32.totalorder %s19, 3
      %p105 = por %p103, %p104
      %p106 = scmp.ne.s32.totalorder %s95, %s96
      %p107 = scmp.eq.s32.totalorder %s19, 0
      %p108 = por %p106, %p107
      %p109 = scmp.ne.s32.totalorder %s95, %s96
      %p110 = scmp.eq.s32.totalorder %s20, 3
      %p111 = por %p109, %p110
      %p113 = scmp.ne.s32.totalorder %s96, %s112
      %p114 = scmp.eq.s32.totalorder %s20, 0
      %p115 = por %p113, %p114
      %p116 = scmp.le.s32.totalorder 1, %s14
      %p117 = scmp.lt.s32.totalorder %s14, 5
      %p118 = pnand %p116, %p117
      %p119 = pneg %p118
      // Predicated region
      $region9: #{tpu_custom_call.1} parent=5 // pred_check
        _
      $region10: #{tpu_custom_call.1} parent=5 // pred_check_branch
        %121 = sbr.rel (%p118) target = $region12
      $region11: #{tpu_custom_call.1} parent=5 // pred_region
        %s122 = ssub.s32 %s14, 1
        // Predicated region
        $region13: #{tpu_custom_call.1} parent=11 // pred_check
          %p123 = pneg %p61
        $region14: #{tpu_custom_call.1} parent=11 // pred_check_branch
          %125 = sbr.rel (%p123) target = $region16
        $region15: #{tpu_custom_call.1} parent=11 // pred_region
          _
        $region16: #{tpu_custom_call.1} parent=11 // pred_fallthru
          _
        // Predicated region
        $region17: #{tpu_custom_call.1} parent=11 // pred_check
          %p126 = pneg %p82
        $region18: #{tpu_custom_call.1} parent=11 // pred_check_branch
          %128 = sbr.rel (%p126) target = $region20
        $region19: #{tpu_custom_call.1} parent=11 // pred_region
          _
        $region20: #{tpu_custom_call.1} parent=11 // pred_fallthru
          _
      $region12: #{tpu_custom_call.1} parent=5 // pred_fallthru
        _
      %p129 = scmp.lt.s32.totalorder %s14, 4
      // Predicated region
      $region21: #{tpu_custom_call.1} parent=5 // pred_check
        %p130 = pneg %p129
      $region22: #{tpu_custom_call.1} parent=5 // pred_check_branch
        %132 = sbr.rel (%p130) target = $region24
      $region23: #{tpu_custom_call.1} parent=5 // pred_region
        // Predicated region
        $region25: #{tpu_custom_call.1} parent=23 // pred_check
          %p133 = pneg %p34
        $region26: #{tpu_custom_call.1} parent=23 // pred_check_branch
          %135 = sbr.rel (%p133) target = $region28
        $region27: #{tpu_custom_call.1} parent=23 // pred_region
          %s136 = smul.u32 16, %s14
          %p137 = scmp.lt.s32.totalorder %s136, 63
          %s138 = scalar_select %p137, %s136, 63
          %s139 = smul.addr %s138, 8
          %s140 = scalar_lea.vmem %s0, %s139
          %s141 = smul.u32 16, %s14
        $region28: #{tpu_custom_call.1} parent=23 // pred_fallthru
          _
      $region24: #{tpu_custom_call.1} parent=5 // pred_fallthru
        _
      %p142 = scmp.le.s32.totalorder 1, %s14
      %p143 = scmp.lt.s32.totalorder %s14, 5
      %p144 = pnand %p142, %p143
      %p145 = pneg %p144
      // Predicated region
      $region29: #{tpu_custom_call.1} parent=5 // pred_check
        _
      $region30: #{tpu_custom_call.1} parent=5 // pred_check_branch
        %147 = sbr.rel (%p144) target = $region32
      $region31: #{tpu_custom_call.1} parent=5 // pred_region
        %s148 = ssub.s32 %s14, 1
        %s149 = smul.u32 16, %s19
        %p150 = scmp.lt.s32.totalorder %s149, 63
        %s151 = scalar_select %p150, %s149, 63
        %s152 = smul.addr %s151, 8
        %s153 = scalar_lea.vmem %s0, %s152
        %p154 = pneg %p40
        %p155 = pneg %p37
        %p156 = pneg %p61
        %p157 = pneg %p58
        %p158 = pneg %p82
        %p159 = pneg %p79
        %p160 = pneg %p108
        %p161 = pneg %p105
        %s162 = sand.u32 %s95, 1
        %s163 = scalar_lea.sflag [#allocation4], %s162
        %s164 = sand.u32 %s95, 1
        %s165 = scalar_lea.vmem [#allocation3], %s164
        %s166 = smul.u32 16, %s19
        %p167 = scmp.lt.s32.totalorder %s166, 63
        %s168 = scalar_select %p167, %s166, 63
        %s169 = smul.addr %s168, 8
        %s170 = scalar_lea.vmem %s0, %s169
        %s171 = smul.u32 16, %s19
        %v172 = vld [vmem:[%s170] sm:$0xff]
        %v173 = vld [vmem:[%s170 + $0x8] sm:$0xff]
        %v174 = vld [vmem:[%s170 + $0x10] sm:$0xff]
        %v175 = vld [vmem:[%s170 + $0x18] sm:$0xff]
        %v176 = vld [vmem:[%s170 + $0x20] sm:$0xff]
        %v177 = vld [vmem:[%s170 + $0x28] sm:$0xff]
        %v178 = vld [vmem:[%s170 + $0x30] sm:$0xff]
        %v179 = vld [vmem:[%s170 + $0x38] sm:$0xff]
        %v180 = vld [vmem:[%s170 + $0x40] sm:$0xff]
        %v181 = vld [vmem:[%s170 + $0x48] sm:$0xff]
        %v182 = vld [vmem:[%s170 + $0x50] sm:$0xff]
        %v183 = vld [vmem:[%s170 + $0x58] sm:$0xff]
        %v184 = vld [vmem:[%s170 + $0x60] sm:$0xff]
        %v185 = vld [vmem:[%s170 + $0x68] sm:$0xff]
        %v186 = vld [vmem:[%s170 + $0x70] sm:$0xff]
        %v187 = vld [vmem:[%s170 + $0x78] sm:$0xff]
        %v188 = vld [vmem:[%s1] sm:$0x1]
        %v189 = vld [vmem:[#allocation2] sm:$0x1]
        %191 = vset.pattern.permute.xlu0 0
        %192 = vperm.xlu0 %191, %v189
        %v193 = vpop.permute.xlu0 %192
        %v195 = vperm.slane %v193, 0
        %vm196 = vcmask 195584
        %v198 = vsel %vm196, %v188, 0
        %v201 = vsel %vm196, %v172, 0
        %v204 = vsel %vm196, %v173, 0
        %v207 = vsel %vm196, %v174, 0
        %v210 = vsel %vm196, %v175, 0
        %v213 = vsel %vm196, %v176, 0
        %v216 = vsel %vm196, %v177, 0
        %v219 = vsel %vm196, %v178, 0
        %v222 = vsel %vm196, %v179, 0
        %v225 = vsel %vm196, %v180, 0
        %v228 = vsel %vm196, %v181, 0
        %v231 = vsel %vm196, %v182, 0
        %v234 = vsel %vm196, %v183, 0
        %v237 = vsel %vm196, %v184, 0
        %v240 = vsel %vm196, %v185, 0
        %v243 = vsel %vm196, %v186, 0
        %v246 = vsel %vm196, %v187, 0
        %248 = vmatpush.xpose.msra.mxu0 %v246
        %249 = vmatpush.xpose.msra.mxu0 %v243
        %250 = vmatpush.xpose.msra.mxu0 %v240
        %251 = vmatpush.xpose.msra.mxu0 %v237
        %252 = vmatpush.xpose.msra.mxu0 %v234
        %253 = vmatpush.xpose.msra.mxu0 %v231
        %254 = vmatpush.xpose.msra.mxu0 %v228
        %255 = vmatpush.xpose.msra.mxu0 %v225
        %256 = vmatpush.xpose.msra.mxu0 %v222
        %257 = vmatpush.xpose.msra.mxu0 %v219
        %258 = vmatpush.xpose.msra.mxu0 %v216
        %259 = vmatpush.xpose.msra.mxu0 %v213
        %260 = vmatpush.xpose.msra.mxu0 %v210
        %261 = vmatpush.xpose.msra.mxu0 %v207
        %262 = vmatpush.xpose.msra.mxu0 %v204
        %263 = vmatpush.xpose.msra.mxu0 %v201
        %264 = vmatmul.f32.gmra.mxu0 %v198
        %v265 = vpop.f32.mrf.mxu0
        %v266 = vadd.f32 %v195, %v265
        %267 = vdwg.mxu0
        %268 = vst [vmem:[%s165] sm:$0x1] %v266
        %s269 = sand.u32 %s95, 1
        %s270 = scalar_lea.sflag [#allocation4], %s269
        %s271 = sand.u32 %s95, 1
        %s272 = scalar_lea.vmem [#allocation3], %s271
        // Predicated region
        $region33: #{tpu_custom_call.1} parent=31 // pred_check
          %p273 = pneg %p105
        $region34: #{tpu_custom_call.1} parent=31 // pred_check_branch
          %275 = sbr.rel (%p273) target = $region36
        $region35: #{tpu_custom_call.1} parent=31 // pred_region
          %277 = vsyncadd %s270, 0
          %s278 = scalar_lea.hbm %s3, %s19
          %s280 = sshll.u32 %s272, 4
          %s281 = int_to_ptr.vmem [resolvable:$true] %s280
          %s282 = sshll.u32 %s278, 4
          %s283 = int_to_ptr.hbm [resolvable:$true] %s282
          %285 = dma.vmem_to_hbm [thread:$0]  %s281, 16, %s283, %s270
        $region36: #{tpu_custom_call.1} parent=31 // pred_fallthru
          _
      $region32: #{tpu_custom_call.1} parent=5 // pred_fallthru
        _
      %p286 = scmp.le.s32.totalorder 2, %s14
      // Predicated region
      $region37: #{tpu_custom_call.1} parent=5 // pred_check
        %p287 = pneg %p286
      $region38: #{tpu_custom_call.1} parent=5 // pred_check_branch
        %289 = sbr.rel (%p287) target = $region40
      $region39: #{tpu_custom_call.1} parent=5 // pred_region
        %s290 = ssub.s32 %s14, 2
        // Predicated region
        $region41: #{tpu_custom_call.1} parent=39 // pred_check
          %p291 = pneg %p111
        $region42: #{tpu_custom_call.1} parent=39 // pred_check_branch
          %293 = sbr.rel (%p291) target = $region44
        $region43: #{tpu_custom_call.1} parent=39 // pred_region
          %s294 = sand.u32 %s96, 1
          %s295 = scalar_lea.sflag [#allocation4], %s294
          %s296 = sand.u32 %s96, 1
          %s297 = scalar_lea.vmem [#allocation3], %s296
          %299 = dma.done %s295, 16
        $region44: #{tpu_custom_call.1} parent=39 // pred_fallthru
          _
      $region40: #{tpu_custom_call.1} parent=5 // pred_fallthru
        _
    $region6: #{tpu_custom_call.1} parent=1 // loop_footer
      %s18 = sadd.s32 1, %s14
    $region7: #{tpu_custom_call.1} parent=1 // loop_footer_branch
      %13 = sbr.rel target = $region3
    $region8: #{tpu_custom_call.1} parent=1 // loop_exit
      _
    %300 = vsyncpa [#allocation4], 1
    %s301 = scalar_lea.sflag [#allocation4], 1
    %302 = vsyncpa %s301, 1

</llo_original>
